<compile_context>
chip_gen: v7x
topology: tpu7x:2x2x1
jax: 0.10.0
libtpu: 0.0.40
codegen_flags: <defaults>
</compile_context>

<pallas_src>
import jax
import jax.numpy as jnp
from jax.experimental import pallas as pl
from jax.experimental.pallas import tpu as pltpu

_LANE = 128
_SQRT_2_OVER_PI = 0.7978845608028654
_GELU_A = 0.044715

_SMALL_BYTES = 256 * 1024              # below this, a single grid step wins
_TARGET_BLOCK_BYTES = 2 * 1024 * 1024  # ~2 MiB/block; 4 buffers in flight = 8 MiB


def _gelu_kernel(x_ref, o_ref):
    x = x_ref[...]
    xf = x.astype(jnp.float32)  # f32 math (no-op for f32; fixes bf16 accuracy)
    inner = _SQRT_2_OVER_PI * (xf + _GELU_A * (xf * xf * xf))
    y = 0.5 * xf * (1.0 + jnp.tanh(inner))  # tanh -> EUP slot (free vs HBM)
    o_ref[...] = y.astype(o_ref.dtype)


def _sublane(dtype):
    # sublane multiple per packed dtype: f32 -> 8, bf16/f16 -> 16, int8/fp8 -> 32
    return {4: 8, 2: 16, 1: 32}.get(jnp.dtype(dtype).itemsize, 8)


def gelu(x, *, block_rows=None):
    """Tanh-approx GELU via a Pallas TPU kernel. Works for any shape/size."""
    orig_shape = x.shape
    dtype = x.dtype
    n = x.size
    if n == 0:
        return x

    itemsize = jnp.dtype(dtype).itemsize
    sub = _sublane(dtype)

    # Flatten to a lane-dense 2D slab; pad at most LANE-1 elements.
    x_flat = jnp.ravel(x)
    pad = (-n) % _LANE
    if pad:
        x_flat = jnp.pad(x_flat, (0, pad))  # GELU(0)=0; tail sliced off below
    total = n + pad

    # Prefer wider contiguous rows (fewer store descriptors) when they fit.
    cols = 8 * _LANE if total % (8 * _LANE) == 0 else _LANE
    rows = total // cols
    x2d = x_flat.reshape(rows, cols)

    total_bytes = total * itemsize
    row_bytes = cols * itemsize

    if total_bytes <= _SMALL_BYTES:
        # Single grid step; block shape == full array (exempt from (8,128) rule).
        br = rows
        grid_rows = 1
    else:
        if block_rows is None:
            block_rows = max(sub, _TARGET_BLOCK_BYTES // row_bytes)
        # Sublane-align the (possibly caller-supplied) tile.
        br = pl.cdiv(block_rows, sub) * sub
        # Keep at least 2 grid steps so both v7x TensorCores get work.
        half = pl.cdiv(pl.cdiv(rows, 2), sub) * sub
        br = max(min(br, half), sub)
        grid_rows = pl.cdiv(rows, br)  # last block may be partial -> masked store

    out2d = pl.pallas_call(
        _gelu_kernel,
        out_shape=jax.ShapeDtypeStruct((rows, cols), dtype),
        grid=(grid_rows,),
        in_specs=[pl.BlockSpec((br, cols), lambda i: (i, 0))],
        out_specs=pl.BlockSpec((br, cols), lambda i: (i, 0)),
        compiler_params=pltpu.CompilerParams(
            dimension_semantics=("parallel",)),
        cost_estimate=pl.CostEstimate(
            flops=10 * n, transcendentals=n, bytes_accessed=2 * n * itemsize),
    )(x2d)

    out_flat = out2d.reshape(-1)
    if pad:
        out_flat = out_flat[:n]
    return out_flat.reshape(orig_shape)


def _gelu_ref(x):
    # Pure-JAX reference, identical formula to the PyTorch module (f32 math).
    xf = x.astype(jnp.float32)
    y = 0.5 * xf * (1.0 + jnp.tanh(
        _SQRT_2_OVER_PI * (xf + _GELU_A * jnp.power(xf, 3))))
    return y.astype(x.dtype)


if __name__ == "__main__":
    # Shapes consistent with the module's usage (GPT feed-forward activations):
    # batch=2, seq=8, hidden=32.
    B, T, D = 2, 8, 32
    key = jax.random.PRNGKey(0)
    x = jax.random.normal(key, (B, T, D), jnp.float32)

    out = jax.block_until_ready(gelu(x))
    ref = _gelu_ref(x)
    assert out.shape == x.shape and out.dtype == x.dtype
    assert bool(jnp.all(jnp.isfinite(out)))
    assert bool(jnp.allclose(out, ref, atol=1e-5, rtol=1e-5))

    # Also exercise the non-lane-aligned (padded) path.
    x2 = jax.random.normal(jax.random.PRNGKey(1), (3, 7, 5), jnp.float32)
    out2 = jax.block_until_ready(gelu(x2))
    assert bool(jnp.allclose(out2, _gelu_ref(x2), atol=1e-5, rtol=1e-5))

    print("KERNEL_OK")
</pallas_src>

<mosaic_0001>
module attributes {stable_mosaic.version = 11 : i64} {
  func.func @_gelu_kernel(%arg0: i32, %arg1: memref<4x128xf32, #tpu.memory_space<vmem>>, %arg2: memref<4x128xf32, #tpu.memory_space<vmem>>) attributes {dimension_semantics = [#tpu.dimension_semantics<parallel>], iteration_bounds = array<i64: 1>, scalar_prefetch = 0 : i64, scratch_operands = 0 : i64, tpu.core_type = #tpu.core_type<tc>, window_params = [{transform_indices = @transform_0, window_bounds = array<i64: 4, 128>}, {transform_indices = @transform_1, window_bounds = array<i64: 4, 128>}]} {
    %c0 = arith.constant 0 : index
    %c0_0 = arith.constant 0 : index
    %0 = vector.load %arg1[%c0, %c0_0] : memref<4x128xf32, #tpu.memory_space<vmem>>, vector<4x128xf32>
    %1 = arith.mulf %0, %0 : vector<4x128xf32>
    %2 = arith.mulf %1, %0 : vector<4x128xf32>
    %cst = arith.constant 4.471500e-02 : f32
    %3 = vector.broadcast %cst : f32 to vector<4x128xf32>
    %4 = arith.mulf %3, %2 : vector<4x128xf32>
    %5 = arith.addf %0, %4 : vector<4x128xf32>
    %cst_1 = arith.constant 0.797884583 : f32
    %6 = vector.broadcast %cst_1 : f32 to vector<4x128xf32>
    %7 = arith.mulf %6, %5 : vector<4x128xf32>
    %cst_2 = arith.constant 5.000000e-01 : f32
    %8 = vector.broadcast %cst_2 : f32 to vector<4x128xf32>
    %9 = arith.mulf %8, %0 : vector<4x128xf32>
    %10 = math.tanh %7 : vector<4x128xf32>
    %cst_3 = arith.constant 1.000000e+00 : f32
    %11 = vector.broadcast %cst_3 : f32 to vector<4x128xf32>
    %12 = arith.addf %11, %10 : vector<4x128xf32>
    %13 = arith.mulf %9, %12 : vector<4x128xf32>
    %c0_4 = arith.constant 0 : index
    %c0_5 = arith.constant 0 : index
    %14 = vector.load %arg2[%c0_4, %c0_5] : memref<4x128xf32, #tpu.memory_space<vmem>>, vector<4x128xf32>
    tpu.vector_store %arg2[%c0_4, %c0_5], %13 {strides = array<i32>} : memref<4x128xf32, #tpu.memory_space<vmem>>, vector<4x128xf32>,
    return
  }
  func.func @transform_0(%arg0: i32) -> (i32, i32) {
    %c0_i32 = arith.constant 0 : i32
    %c0_i32_0 = arith.constant 0 : i32
    return %arg0, %c0_i32 : i32, i32
  }
  func.func @transform_1(%arg0: i32) -> (i32, i32) {
    %c0_i32 = arith.constant 0 : i32
    %c0_i32_0 = arith.constant 0 : i32
    return %arg0, %c0_i32 : i32, i32
  }
}

</mosaic_0001>

<llo_original>
// kernel: tpu_custom_call.1
$region0: #{tpu_custom_call.1}
  #allocation0 [shape = 'u32[]', space=smem, size = 0x4, offset = 0x4, fixed_abs, tag = 'smem constant byte address 0x4 - core index']
  #allocation1 [shape = 'u32[144,128]{1,0:T(1,128)}', space=vmem, size = 0x12000, scoped, tag = 'internal scratch']
  %s0 = inlined_call_operand.hbm [shape: f32[4,128], index: 0, kind: input, shape index: {}]
  %s1 = inlined_call_operand.hbm [shape: f32[4,128], index: 1, kind: output, shape index: {}]
  %s2 = sld [smem:[#allocation0]]
  $region18: #{tpu_custom_call.1} parent=0
    _
  %s4 = ssub.s32 1, %s2
  %s5 = scalar_select 0, %s4, %s2
  $region1: #{tpu_custom_call.1} parent=0
    #allocation2 [shape = 'u8[2048]{0}', space=vmem, size = 0x800, scoped, tag = 'input window, operand 0, single buffered']
    #allocation3 [shape = 's32[1]{0}', space=sflag, size = 0x4, scoped, tag = 'scoped memory for tpu_custom_call.1']
    #allocation4 [shape = 's32[1]{0}', space=sflag, size = 0x4, scoped, tag = 'scoped memory for tpu_custom_call.1']
    #allocation5 [shape = 'u8[2048]{0}', space=vmem, size = 0x800, scoped, tag = 'output window, operand 0, single buffered']
    %6 = vsyncpa [#allocation3], 0
    %7 = vsyncpa [#allocation4], 0
    // Predicated region
    $region2: #{tpu_custom_call.1} parent=1 // pred_check
      _
    $region3: #{tpu_custom_call.1} parent=1 // pred_check_branch
      %9 = sbr.rel (0) target = $region5
    $region4: #{tpu_custom_call.1} parent=1 // pred_region
      %s11 = ssub.s32 64, 64
      %12 = vsyncadd [#allocation3], %s11
      %s14 = sshll.u32 [#allocation2], 4
      %s15 = int_to_ptr.vmem [resolvable:$true] %s14
      %17 = dma.hbm_to_vmem [thread:$0]  %s0, 64, %s15, [#allocation3]
    $region5: #{tpu_custom_call.1} parent=1 // pred_fallthru
      _
    // Predicated region
    $region6: #{tpu_custom_call.1} parent=1 // pred_check
      _
    $region7: #{tpu_custom_call.1} parent=1 // pred_check_branch
      %19 = sbr.rel (0) target = $region9
    $region8: #{tpu_custom_call.1} parent=1 // pred_region
      %20 = dma.done [#allocation3], 64
    $region9: #{tpu_custom_call.1} parent=1 // pred_fallthru
      _
    %v21 = vld [vmem:[#allocation2] sm:$0xf]
    %v22 = vmul.f32 %v21, %v21
    %v23 = vmul.f32 %v22, %v21
    %v24 = vmul.f32 %v23, 0.044715
    %v25 = vadd.f32 %v21, %v24
    %v26 = vmul.f32 %v25, 0.7978846
    %v27 = vmul.f32 %v21, 0.5
    %v28 = vtanh.pop %v26
    %v29 = vadd.f32 %v28, 1.0
    %v30 = vmul.f32 %v27, %v29
    %31 = vst [vmem:[#allocation5] sm:$0xf] %v30
    // Predicated region
    $region10: #{tpu_custom_call.1} parent=1 // pred_check
      _
    $region11: #{tpu_custom_call.1} parent=1 // pred_check_branch
      %33 = sbr.rel (0) target = $region13
    $region12: #{tpu_custom_call.1} parent=1 // pred_region
      %s35 = ssub.s32 64, 64
      %36 = vsyncadd [#allocation4], %s35
      %s38 = sshll.u32 [#allocation5], 4
      %s39 = int_to_ptr.vmem [resolvable:$true] %s38
      %41 = dma.vmem_to_hbm [thread:$0]  %s39, 64, %s1, [#allocation4]
    $region13: #{tpu_custom_call.1} parent=1 // pred_fallthru
      _
    // Predicated region
    $region14: #{tpu_custom_call.1} parent=1 // pred_check
      _
    $region15: #{tpu_custom_call.1} parent=1 // pred_check_branch
      %43 = sbr.rel (0) target = $region17
    $region16: #{tpu_custom_call.1} parent=1 // pred_region
      %44 = dma.done [#allocation4], 64
    $region17: #{tpu_custom_call.1} parent=1 // pred_fallthru
      _
    %45 = vsyncpa [#allocation3], 1
    %46 = vsyncpa [#allocation4], 1

</llo_original>
